<compile_context>
chip_gen: v7x
topology: tpu7x:2x2x1
jax: 0.10.0
libtpu: 0.0.40
codegen_flags: <defaults>
</compile_context>

<pallas_src>
import jax
import jax.numpy as jnp
from jax import lax
from jax.experimental import pallas as pl
from jax.experimental.pallas import tpu as pltpu


def _round_up(x: int, m: int) -> int:
    return ((x + m - 1) // m) * m


def _sub_loss_kernel(u_ref, mask_ref, out_ref, acc_ref):
    """Per-B-tile positive-adjacent-diff partial sums, accumulated over steps."""
    i = pl.program_id(1)

    @pl.when(i == 0)
    def _init():
        acc_ref[...] = jnp.zeros_like(acc_ref)

    u = u_ref[...].astype(jnp.float32)                 # (tile_b, n_pad)
    tile_b, n_pad = u.shape
    # nxt[:, j] = u[:, (j + 1) % n_pad]  (XLU lane rotate, positive shift)
    nxt = pltpu.roll(u, shift=n_pad - 1, axis=1)
    pos = jnp.maximum(u - nxt, 0.0)
    # Reduce the sublane-group axis with plain VPU adds (no per-step XLU
    # cross-lane reduce); result stays vreg-shaped along lanes.
    partial = jnp.sum(pos.reshape(tile_b // 8, 8, n_pad), axis=0)   # (8, n_pad)
    # Column mask kills the wrap-around column and the N padding; padded B
    # rows are all-zero so their diffs are already 0.
    acc_ref[...] += partial * mask_ref[...]

    @pl.when(i == pl.num_programs(1) - 1)
    def _finalize():
        out_ref[...] = acc_ref[...]


def _sub_loss_ref(pre, label):
    """Pure-JAX reference mirroring the PyTorch forward."""
    B, _ = pre.shape
    idx = jnp.argsort(label, axis=1)
    s = jnp.take_along_axis(pre.astype(jnp.float32), idx, axis=1)
    d = s[:, :-1] - s[:, 1:]
    return jnp.sum(jnp.where(d > 0, d, 0.0)) / B


def sub_loss(uncertainty_pre, uncertainty_label, *, force_pallas=False):
    B, N = uncertainty_pre.shape

    # For small problems, let XLA fuse sort+diff+sum; the Pallas path only
    # pays off once the streaming reduce is many HBM-roofline microseconds.
    if not force_pallas and B * N < (1 << 18):
        return _sub_loss_ref(uncertainty_pre, uncertainty_label)

    # TODO(synk): torch.argsort gives no tie-break guarantee; lax.sort is
    # stable, so ties in uncertainty_label may order differently than PyTorch.
    # Single two-operand sort: sort `pre` values by `label` keys (no index
    # materialization, no separate gather pass).
    _, sorted_u = lax.sort((uncertainty_label, uncertainty_pre),
                           dimension=1, num_keys=1)
    if sorted_u.dtype not in (jnp.dtype(jnp.float32), jnp.dtype(jnp.bfloat16),
                              jnp.dtype(jnp.float16)):
        sorted_u = sorted_u.astype(jnp.float32)

    # Tiling: lane dim padded to 128; B tiles are multiples of 16 (legal for
    # f32/bf16/f16 sublane packing). Input block capped at ~1.5M elements
    # (~6 MiB f32-equivalent) so double-buffered DMA + in-kernel f32
    # temporaries stay inside the explicit VMEM limit on every generation.
    n_pad = _round_up(max(N, 1), 128)
    tile_b_cap = max(16, (((6 << 20) // 4) // n_pad) // 16 * 16)
    tile_b = min(_round_up(B, 16), tile_b_cap)

    raw_tiles = -(-B // tile_b)
    num_cores = 2 if raw_tiles >= 2 else 1          # v7x: 2 TCs; serial elsewhere
    b_pad = _round_up(B, tile_b * num_cores)
    steps = b_pad // (tile_b * num_cores)

    if (b_pad != B) or (n_pad != N):
        # Zero padding is inert: padded rows have zero diffs; padded /
        # wrap-around columns are killed by the column mask.
        # TODO(synk): verify in the HLO that this pad fuses with the sort
        # producer; otherwise write the sort output into a pre-sized buffer.
        sorted_u = jnp.pad(sorted_u, ((0, b_pad - B), (0, n_pad - N)))

    col = jnp.arange(n_pad, dtype=jnp.int32)
    mask = jnp.broadcast_to((col < (N - 1)).astype(jnp.float32)[None, :],
                            (8, n_pad))

    partials = pl.pallas_call(
        _sub_loss_kernel,
        out_shape=jax.ShapeDtypeStruct((num_cores * 8, n_pad), jnp.float32),
        grid=(num_cores, steps),
        in_specs=[
            pl.BlockSpec((tile_b, n_pad), lambda c, i: (c * steps + i, 0)),
            pl.BlockSpec((8, n_pad), lambda c, i: (0, 0)),      # resident mask
        ],
        out_specs=pl.BlockSpec((8, n_pad), lambda c, i: (c, 0)),
        scratch_shapes=[pltpu.VMEM((8, n_pad), jnp.float32)],
        compiler_params=pltpu.CompilerParams(
            dimension_semantics=("parallel", "arbitrary"),
            vmem_limit_bytes=48 << 20,
        ),
    )(sorted_u, mask)

    # Single cross-lane reduce on a tiny array + the 1/B normalization.
    return jnp.sum(partials) / B


if __name__ == "__main__":
    key = jax.random.PRNGKey(0)
    k1, k2 = jax.random.split(key)

    # Small shape consistent with the module's (B, N) inputs.
    B, N = 4, 16
    uncertainty_pre = jax.random.normal(k1, (B, N), dtype=jnp.float32)
    uncertainty_label = jax.random.normal(k2, (B, N), dtype=jnp.float32)

    out = sub_loss(uncertainty_pre, uncertainty_label, force_pallas=True)
    out = jax.block_until_ready(out)
    ref = _sub_loss_ref(uncertainty_pre, uncertainty_label)
    assert jnp.allclose(out, ref, atol=1e-5, rtol=1e-5), (out, ref)

    # Second shape exercising multi-tile, two-"core" grid, B and N padding.
    k3, k4 = jax.random.split(k1)
    B2, N2 = 40, 200
    pre2 = jax.random.normal(k3, (B2, N2), dtype=jnp.float32)
    lab2 = jax.random.normal(k4, (B2, N2), dtype=jnp.float32)
    out2 = jax.block_until_ready(sub_loss(pre2, lab2, force_pallas=True))
    ref2 = _sub_loss_ref(pre2, lab2)
    assert jnp.allclose(out2, ref2, atol=1e-5, rtol=1e-5), (out2, ref2)

    print("KERNEL_OK")
</pallas_src>

<mosaic_0001>
module attributes {stable_mosaic.version = 11 : i64} {
  func.func @_sub_loss_kernel(%arg0: i32, %arg1: i32, %arg2: memref<16x128xf32, #tpu.memory_space<vmem>>, %arg3: memref<8x128xf32, #tpu.memory_space<vmem>>, %arg4: memref<8x128xf32, #tpu.memory_space<vmem>>, %arg5: memref<8x128xf32, #tpu.memory_space<vmem>>) attributes {dimension_semantics = [#tpu.dimension_semantics<parallel>, #tpu.dimension_semantics<arbitrary>], iteration_bounds = array<i64: 1, 1>, scalar_prefetch = 0 : i64, scratch_operands = 1 : i64, tpu.core_type = #tpu.core_type<tc>, window_params = [{transform_indices = @transform_0, window_bounds = array<i64: 16, 128>}, {pipeline_mode = #tpu.pipeline_mode<synchronous>, transform_indices = @transform_1, window_bounds = array<i64: 8, 128>}, {transform_indices = @transform_2, window_bounds = array<i64: 8, 128>}]} {
    %c0_i32 = arith.constant 0 : i32
    %0 = arith.cmpi eq, %arg1, %c0_i32 : i32
    %1 = arith.extui %0 : i1 to i32
    %c0_i32_0 = arith.constant 0 : i32
    %2 = arith.cmpi ne, %1, %c0_i32_0 : i32
    scf.if %2 {
      %cst_11 = arith.constant 0.000000e+00 : f32
      %18 = vector.broadcast %cst_11 : f32 to vector<8x128xf32>
      %c0_12 = arith.constant 0 : index
      %c0_13 = arith.constant 0 : index
      %19 = vector.load %arg5[%c0_12, %c0_13] : memref<8x128xf32, #tpu.memory_space<vmem>>, vector<8x128xf32>
      tpu.vector_store %arg5[%c0_12, %c0_13], %18 {strides = array<i32>} : memref<8x128xf32, #tpu.memory_space<vmem>>, vector<8x128xf32>,
    } else {
    }
    %c0 = arith.constant 0 : index
    %c0_1 = arith.constant 0 : index
    %3 = vector.load %arg2[%c0, %c0_1] : memref<16x128xf32, #tpu.memory_space<vmem>>, vector<16x128xf32>
    %c127_i32 = arith.constant 127 : i32
    %4 = tpu.dynamic_rotate %3 by %c127_i32 dim 1 : vector<16x128xf32>, i32 -> vector<16x128xf32>
    %5 = arith.subf %3, %4 : vector<16x128xf32>
    %cst = arith.constant 0.000000e+00 : f32
    %6 = vector.broadcast %cst : f32 to vector<16x128xf32>
    %7 = arith.maximumf %5, %6 : vector<16x128xf32>
    %8 = vector.shape_cast %7 : vector<16x128xf32> to vector<2x8x128xf32>
    %cst_2 = arith.constant dense<0.000000e+00> : vector<8x128xf32>
    %9 = vector.multi_reduction <add>, %8, %cst_2 [0] : vector<2x8x128xf32> to vector<8x128xf32>
    %c0_3 = arith.constant 0 : index
    %c0_4 = arith.constant 0 : index
    %10 = vector.load %arg5[%c0_3, %c0_4] : memref<8x128xf32, #tpu.memory_space<vmem>>, vector<8x128xf32>
    %c0_5 = arith.constant 0 : index
    %c0_6 = arith.constant 0 : index
    %11 = vector.load %arg3[%c0_5, %c0_6] : memref<8x128xf32, #tpu.memory_space<vmem>>, vector<8x128xf32>
    %12 = arith.mulf %9, %11 : vector<8x128xf32>
    %13 = arith.addf %10, %12 : vector<8x128xf32>
    %c0_7 = arith.constant 0 : index
    %c0_8 = arith.constant 0 : index
    %14 = vector.load %arg5[%c0_7, %c0_8] : memref<8x128xf32, #tpu.memory_space<vmem>>, vector<8x128xf32>
    tpu.vector_store %arg5[%c0_7, %c0_8], %13 {strides = array<i32>} : memref<8x128xf32, #tpu.memory_space<vmem>>, vector<8x128xf32>,
    %c0_i32_9 = arith.constant 0 : i32
    %15 = arith.cmpi eq, %arg1, %c0_i32_9 : i32
    %16 = arith.extui %15 : i1 to i32
    %c0_i32_10 = arith.constant 0 : i32
    %17 = arith.cmpi ne, %16, %c0_i32_10 : i32
    scf.if %17 {
      %c0_11 = arith.constant 0 : index
      %c0_12 = arith.constant 0 : index
      %18 = vector.load %arg5[%c0_11, %c0_12] : memref<8x128xf32, #tpu.memory_space<vmem>>, vector<8x128xf32>
      %c0_13 = arith.constant 0 : index
      %c0_14 = arith.constant 0 : index
      %19 = vector.load %arg4[%c0_13, %c0_14] : memref<8x128xf32, #tpu.memory_space<vmem>>, vector<8x128xf32>
      tpu.vector_store %arg4[%c0_13, %c0_14], %18 {strides = array<i32>} : memref<8x128xf32, #tpu.memory_space<vmem>>, vector<8x128xf32>,
    } else {
    }
    return
  }
  func.func @transform_0(%arg0: i32, %arg1: i32) -> (i32, i32) {
    %c1_i32 = arith.constant 1 : i32
    %0 = arith.muli %arg0, %c1_i32 : i32
    %1 = arith.addi %0, %arg1 : i32
    %c0_i32 = arith.constant 0 : i32
    %c0_i32_0 = arith.constant 0 : i32
    return %1, %c0_i32 : i32, i32
  }
  func.func @transform_1(%arg0: i32, %arg1: i32) -> (i32, i32) {
    %c0_i32 = arith.constant 0 : i32
    %c0_i32_0 = arith.constant 0 : i32
    %c0_i32_1 = arith.constant 0 : i32
    return %c0_i32, %c0_i32_0 : i32, i32
  }
  func.func @transform_2(%arg0: i32, %arg1: i32) -> (i32, i32) {
    %c0_i32 = arith.constant 0 : i32
    %c0_i32_0 = arith.constant 0 : i32
    return %arg0, %c0_i32 : i32, i32
  }
}

</mosaic_0001>

<llo_original>
// kernel: tpu_custom_call.1
$region0: #{tpu_custom_call.1}
  #allocation0 [shape = 'u32[]', space=smem, size = 0x4, offset = 0x4, fixed_abs, tag = 'smem constant byte address 0x4 - core index']
  #allocation1 [shape = 'u32[144,128]{1,0:T(1,128)}', space=vmem, size = 0x12000, scoped, tag = 'internal scratch']
  #allocation2 [shape = 'f32[8,128]{1,0:T(8,128)}', space=vmem, size = 0x1000, scoped, tag = 'scratch operand']
  %s0 = inlined_call_operand.hbm [shape: f32[16,128], index: 0, kind: input, shape index: {}]
  %s1 = inlined_call_operand.hbm [shape: f32[8,128], index: 1, kind: input, shape index: {}]
  %s2 = inlined_call_operand.hbm [shape: f32[8,128], index: 2, kind: output, shape index: {}]
  %s3 = sld [smem:[#allocation0]]
  $region34: #{tpu_custom_call.1} parent=0
    _
  %s5 = ssub.s32 1, %s3
  %s6 = scalar_select 0, %s5, %s3
  $region1: #{tpu_custom_call.1} parent=0
    #allocation3 [shape = 'u8[8192]{0}', space=vmem, size = 0x2000, scoped, tag = 'input window, operand 0, single buffered']
    #allocation4 [shape = 's32[1]{0}', space=sflag, size = 0x4, scoped, tag = 'scoped memory for tpu_custom_call.1']
    #allocation5 [shape = 's32[1]{0}', space=sflag, size = 0x4, scoped, tag = 'scoped memory for tpu_custom_call.1']
    #allocation6 [shape = 'u8[4096]{0}', space=vmem, size = 0x1000, scoped, tag = 'input window, operand 1, single buffered']
    #allocation7 [shape = 's32[1]{0}', space=sflag, size = 0x4, scoped, tag = 'scoped memory for tpu_custom_call.1']
    #allocation8 [shape = 'u8[4096]{0}', space=vmem, size = 0x1000, scoped, tag = 'output window, operand 0, single buffered']
    %7 = vsyncpa [#allocation4], 0
    %8 = vsyncpa [#allocation7], 0
    %9 = vsyncpa [#allocation5], 0
    // Predicated region
    $region2: #{tpu_custom_call.1} parent=1 // pred_check
      _
    $region3: #{tpu_custom_call.1} parent=1 // pred_check_branch
      %11 = sbr.rel (0) target = $region5
    $region4: #{tpu_custom_call.1} parent=1 // pred_region
      %s12 = sadd.s32 0, 0
      %s13 = smul.u32 2, %s12
      %s15 = ssub.s32 256, 256
      %16 = vsyncadd [#allocation4], %s15
      %s17 = smul.addr %s13, 128
      %s18 = scalar_lea.hbm %s0, %s17
      %s19 = sshll.u32 [#allocation3], 4
      %s20 = int_to_ptr.vmem [resolvable:$true] %s19
      %25 = dma.hbm_to_vmem [thread:$0]  %s18, 256, %s20, [#allocation4], 128, 128, 8
    $region5: #{tpu_custom_call.1} parent=1 // pred_fallthru
      _
    // Predicated region
    $region6: #{tpu_custom_call.1} parent=1 // pred_check
      _
    $region7: #{tpu_custom_call.1} parent=1 // pred_check_branch
      %27 = sbr.rel (0) target = $region9
    $region8: #{tpu_custom_call.1} parent=1 // pred_region
      %s29 = ssub.s32 128, 128
      %30 = vsyncadd [#allocation7], %s29
      %s32 = sshll.u32 [#allocation6], 4
      %s33 = int_to_ptr.vmem [resolvable:$true] %s32
      %35 = dma.hbm_to_vmem [thread:$0]  %s1, 128, %s33, [#allocation7]
    $region9: #{tpu_custom_call.1} parent=1 // pred_fallthru
      _
    // Predicated region
    $region10: #{tpu_custom_call.1} parent=1 // pred_check
      _
    $region11: #{tpu_custom_call.1} parent=1 // pred_check_branch
      %37 = sbr.rel (0) target = $region13
    $region12: #{tpu_custom_call.1} parent=1 // pred_region
      %38 = dma.done [#allocation4], 256
    $region13: #{tpu_custom_call.1} parent=1 // pred_fallthru
      _
    // Predicated region
    $region14: #{tpu_custom_call.1} parent=1 // pred_check
      _
    $region15: #{tpu_custom_call.1} parent=1 // pred_check_branch
      %40 = sbr.rel (0) target = $region17
    $region16: #{tpu_custom_call.1} parent=1 // pred_region
      %41 = dma.done [#allocation7], 128
    $region17: #{tpu_custom_call.1} parent=1 // pred_fallthru
      _
    %s42 = sadd.s32 0, 0
    %s43 = smul.u32 2, %s42
    %p44 = scmp.eq.s32.totalorder 0, 0
    // Predicated region
    $region18: #{tpu_custom_call.1} parent=1 // pred_check
      %p45 = pneg %p44
    $region19: #{tpu_custom_call.1} parent=1 // pred_check_branch
      %47 = sbr.rel (%p45) target = $region21
    $region20: #{tpu_custom_call.1} parent=1 // pred_region
      %48 = vst [vmem:[#allocation2] sm:$0xff] 0.0
    $region21: #{tpu_custom_call.1} parent=1 // pred_fallthru
      _
    %v49 = vld [vmem:[#allocation3] sm:$0xff]
    %v50 = vld [vmem:[#allocation3 + $0x8] sm:$0xff]
    %51 = vrot.lane.b32.xlu0 %v49, 127
    %v52 = vpop.permute.xlu0 %51
    %53 = vrot.lane.b32.xlu0 %v50, 127
    %v54 = vpop.permute.xlu0 %53
    %v55 = vsub.f32 %v49, %v52
    %v56 = vsub.f32 %v50, %v54
    %v57 = vmax.f32 %v55, 0.0
    %v58 = vmax.f32 %v56, 0.0
    %v59 = vadd.f32 %v57, %v58
    %v60 = vld [vmem:[#allocation2] sm:$0xff]
    %v61 = vld [vmem:[#allocation6] sm:$0xff]
    %v62 = vmul.f32 %v59, %v61
    %v63 = vadd.f32 %v60, %v62
    %64 = vst [vmem:[#allocation2] sm:$0xff] %v63
    // Predicated region
    $region22: #{tpu_custom_call.1} parent=1 // pred_check
      %p65 = pneg %p44
    $region23: #{tpu_custom_call.1} parent=1 // pred_check_branch
      %67 = sbr.rel (%p65) target = $region25
    $region24: #{tpu_custom_call.1} parent=1 // pred_region
      %v68 = vld [vmem:[#allocation2] sm:$0xff]
      %69 = vst [vmem:[#allocation8] sm:$0xff] %v68
    $region25: #{tpu_custom_call.1} parent=1 // pred_fallthru
      _
    // Predicated region
    $region26: #{tpu_custom_call.1} parent=1 // pred_check
      _
    $region27: #{tpu_custom_call.1} parent=1 // pred_check_branch
      %71 = sbr.rel (0) target = $region29
    $region28: #{tpu_custom_call.1} parent=1 // pred_region
      %s73 = ssub.s32 128, 128
      %74 = vsyncadd [#allocation5], %s73
      %s76 = sshll.u32 [#allocation8], 4
      %s77 = int_to_ptr.vmem [resolvable:$true] %s76
      %79 = dma.vmem_to_hbm [thread:$0]  %s77, 128, %s2, [#allocation5]
    $region29: #{tpu_custom_call.1} parent=1 // pred_fallthru
      _
    // Predicated region
    $region30: #{tpu_custom_call.1} parent=1 // pred_check
      _
    $region31: #{tpu_custom_call.1} parent=1 // pred_check_branch
      %81 = sbr.rel (0) target = $region33
    $region32: #{tpu_custom_call.1} parent=1 // pred_region
      %82 = dma.done [#allocation5], 128
    $region33: #{tpu_custom_call.1} parent=1 // pred_fallthru
      _
    %83 = vsyncpa [#allocation4], 1
    %84 = vsyncpa [#allocation7], 1
    %85 = vsyncpa [#allocation5], 1

</llo_original>
